<compile_context>
chip_gen: v6e
topology: v6e:2x2x1
jax: 0.10.0
libtpu: 0.0.40
codegen_flags: <defaults>
</compile_context>

<pallas_src>
import jax
import jax.numpy as jnp
from jax.experimental import pallas as pl
from jax.experimental.pallas import tpu as pltpu


def _round_up(v, m):
    return ((v + m - 1) // m) * m


# ---------------------------------------------------------------------------
# Fused kernel
# ---------------------------------------------------------------------------
def _shift_right_zero(a, shift):
    """a[:, t] -> a[:, t - shift], zero-filled for t < shift (causal shift)."""
    if shift == 0:
        return a
    rolled = pltpu.roll(a, shift, axis=1)                 # XLU lane rotation
    lane = jax.lax.broadcasted_iota(jnp.int32, a.shape, 1)
    return jnp.where(lane < shift, 0.0, rolled)


def _causal_conv(h, w_stacked, b, k, d):
    """Causal dilated conv (Chomp1d folded in) as ONE MXU matmul.

    h: (C_in, L) f32;  w_stacked: (C_out, k*C_in) bf16 with tap j occupying
    columns [j*C_in, (j+1)*C_in);  b: (C_out, 1) f32.
    """
    c_in = h.shape[0]
    assert w_stacked.shape[1] == k * c_in
    parts = [_shift_right_zero(h, (k - 1 - j) * d) for j in range(k)]
    stacked = parts[0] if k == 1 else jnp.concatenate(parts, axis=0)
    out = jnp.dot(w_stacked, stacked.astype(jnp.bfloat16),
                  preferred_element_type=jnp.float32)
    return out + b                                        # bias after the matmul


def _make_tcn_kernel(layer_meta, k):
    """layer_meta: static tuple of (dilation, has_downsample) per level."""

    def kernel(x_ref, *refs):
        o_ref = refs[-1]
        h = x_ref[0]                                      # (C0p, Lp) f32
        i = 0
        for (d, has_down) in layer_meta:                  # unrolled at trace time
            w1 = refs[i][...]
            b1 = refs[i + 1][...]
            w2 = refs[i + 2][...]
            b2 = refs[i + 3][...]
            i += 4
            if has_down:
                wd = refs[i][...]
                bd = refs[i + 1][...]
                i += 2
            # conv1 + chomp + relu   (dropout == identity at inference)
            h1 = jnp.maximum(_causal_conv(h, w1, b1, k, d), 0.0)
            # conv2 + chomp + relu
            h2 = jnp.maximum(_causal_conv(h1, w2, b2, k, d), 0.0)
            # residual (1x1 downsample conv if channel counts differ) + relu
            if has_down:
                res = jnp.dot(wd, h.astype(jnp.bfloat16),
                              preferred_element_type=jnp.float32) + bd
            else:
                res = h
            h = jnp.maximum(h2 + res, 0.0)
        o_ref[0] = h

    return kernel


# ---------------------------------------------------------------------------
# Wrapper: pad to lane/sublane-dense shapes, stack taps, call the fused kernel
# ---------------------------------------------------------------------------
def tcn_forward(x, params, k):
    """x: (N, num_inputs, L) f32; params: list of per-level dicts from init."""
    N, C0, L = x.shape
    Lp = _round_up(L, 128)
    C0p = _round_up(C0, 8)

    # Right-pad time (causally inert) and zero-pad channels to sublane multiple.
    x_p = jnp.pad(x.astype(jnp.float32), ((0, 0), (0, C0p - C0), (0, Lp - L)))

    in_specs = [pl.BlockSpec((1, C0p, Lp), lambda n: (n, 0, 0))]
    args = [x_p]
    layer_meta = []

    def const2d(shape):
        return pl.BlockSpec(shape, lambda n: (0, 0))

    C_in, C_in_p = C0, C0p
    for p in params:
        w1, b1, w2, b2, wd, bd, d = (p["w1"], p["b1"], p["w2"], p["b2"],
                                     p["wd"], p["bd"], p["d"])
        C_out = w1.shape[0]
        C_out_p = _round_up(C_out, 8)
        has_down = wd is not None

        def stack_taps(w, cop, cip):
            # (C_out, C_in, k) -> zero-pad channels -> (C_out_p, k*C_in_p) bf16
            wp = jnp.pad(w, ((0, cop - w.shape[0]), (0, cip - w.shape[1]), (0, 0)))
            return jnp.transpose(wp, (0, 2, 1)).reshape(cop, k * cip).astype(jnp.bfloat16)

        w1s = stack_taps(w1, C_out_p, C_in_p)
        w2s = stack_taps(w2, C_out_p, C_out_p)
        b1p = jnp.pad(b1, (0, C_out_p - C_out)).reshape(C_out_p, 1).astype(jnp.float32)
        b2p = jnp.pad(b2, (0, C_out_p - C_out)).reshape(C_out_p, 1).astype(jnp.float32)

        args += [w1s, b1p, w2s, b2p]
        in_specs += [const2d(w1s.shape), const2d(b1p.shape),
                     const2d(w2s.shape), const2d(b2p.shape)]
        if has_down:
            wdp = jnp.pad(wd, ((0, C_out_p - C_out), (0, C_in_p - C_in))
                          ).astype(jnp.bfloat16)
            bdp = jnp.pad(bd, (0, C_out_p - C_out)).reshape(C_out_p, 1).astype(jnp.float32)
            args += [wdp, bdp]
            in_specs += [const2d(wdp.shape), const2d(bdp.shape)]

        layer_meta.append((d, has_down))
        C_in, C_in_p = C_out, C_out_p

    kernel = _make_tcn_kernel(tuple(layer_meta), k)
    out = pl.pallas_call(
        kernel,
        out_shape=jax.ShapeDtypeStruct((N, C_in_p, Lp), jnp.float32),
        grid_spec=pltpu.PrefetchScalarGridSpec(
            num_scalar_prefetch=0,
            grid=(N,),
            in_specs=in_specs,
            out_specs=pl.BlockSpec((1, C_in_p, Lp), lambda n: (n, 0, 0)),
        ),
        compiler_params=pltpu.CompilerParams(
            dimension_semantics=("parallel",),
            vmem_limit_bytes=40 * 1024 * 1024),
    )(*args)
    return out[:, :C_in, :L]


# ---------------------------------------------------------------------------
# Parameter init (mirrors PyTorch: normal(0, 0.01) + weight_norm, Conv1d bias)
# ---------------------------------------------------------------------------
def _weight_norm_conv_weight(key, C_out, C_in, k):
    # v ~ N(0, 0.01); weight_norm (dim=0): w = g * v / ||v||, g initialized to
    # ||v|| per output channel, so numerically w == v.
    v = 0.01 * jax.random.normal(key, (C_out, C_in, k), jnp.float32)
    norm = jnp.sqrt(jnp.sum(v * v, axis=(1, 2), keepdims=True))
    return norm * v / jnp.maximum(norm, 1e-12)


def init_tcn_params(key, num_inputs, num_channels, k):
    params = []
    for i, C_out in enumerate(num_channels):
        C_in = num_inputs if i == 0 else num_channels[i - 1]
        key, k1, k2, k3, k4, k5, k6 = jax.random.split(key, 7)
        w1 = _weight_norm_conv_weight(k1, C_out, C_in, k)      # (C_out, C_in, k)
        w2 = _weight_norm_conv_weight(k2, C_out, C_out, k)
        lim1 = 1.0 / float((C_in * k) ** 0.5)
        lim2 = 1.0 / float((C_out * k) ** 0.5)
        b1 = jax.random.uniform(k3, (C_out,), jnp.float32, -lim1, lim1)
        b2 = jax.random.uniform(k4, (C_out,), jnp.float32, -lim2, lim2)
        if C_in != C_out:
            wd = 0.01 * jax.random.normal(k5, (C_out, C_in), jnp.float32)
            limd = 1.0 / float(C_in ** 0.5)
            bd = jax.random.uniform(k6, (C_out,), jnp.float32, -limd, limd)
        else:
            wd, bd = None, None
        params.append(dict(w1=w1, b1=b1, w2=w2, b2=b2, wd=wd, bd=bd, d=2 ** i))
    return params


# --- pure-JAX reference (same math / same bf16 matmul numerics, no Pallas) ---
def _ref_block(x, w1, b1, w2, b2, wd, bd, k, d):
    def causal_conv(h, w, b):
        L = h.shape[-1]
        acc = jnp.zeros((h.shape[0], w.shape[0], L), jnp.float32)
        for j in range(k):
            shift = (k - 1 - j) * d
            hs = jnp.pad(h, ((0, 0), (0, 0), (shift, 0)))[:, :, :L]
            acc = acc + jnp.einsum(
                "oc,ncl->nol",
                w[:, :, j].astype(jnp.bfloat16), hs.astype(jnp.bfloat16),
                preferred_element_type=jnp.float32)
        return acc + b.reshape(1, -1, 1)

    h1 = jax.nn.relu(causal_conv(x, w1, b1))
    out = jax.nn.relu(causal_conv(h1, w2, b2))
    if wd is None:
        res = x
    else:
        res = jnp.einsum("oc,ncl->nol", wd.astype(jnp.bfloat16),
                         x.astype(jnp.bfloat16),
                         preferred_element_type=jnp.float32) + bd.reshape(1, -1, 1)
    return jax.nn.relu(out + res)


if __name__ == "__main__":
    key = jax.random.PRNGKey(0)
    N, num_inputs, L = 2, 4, 16
    num_channels = [8, 8]          # 2 levels (dilations 1, 2)
    ksize = 2

    pkey, xkey = jax.random.split(key)
    params = init_tcn_params(pkey, num_inputs, num_channels, ksize)
    x = jax.random.normal(xkey, (N, num_inputs, L), jnp.float32)

    y = tcn_forward(x, params, ksize)
    y = jax.block_until_ready(y)

    y_ref = x
    for p in params:
        y_ref = _ref_block(y_ref, p["w1"], p["b1"], p["w2"], p["b2"],
                           p["wd"], p["bd"], ksize, p["d"])

    assert y.shape == (N, num_channels[-1], L)
    assert jnp.allclose(y, y_ref, atol=1e-4, rtol=1e-4)

    print("KERNEL_OK")
</pallas_src>

<mosaic_0001>
module attributes {stable_mosaic.version = 11 : i64} {
  func.func @kernel(%arg0: i32, %arg1: memref<1x8x128xf32, #tpu.memory_space<vmem>>, %arg2: memref<8x16xbf16, #tpu.memory_space<vmem>>, %arg3: memref<8x1xf32, #tpu.memory_space<vmem>>, %arg4: memref<8x16xbf16, #tpu.memory_space<vmem>>, %arg5: memref<8x1xf32, #tpu.memory_space<vmem>>, %arg6: memref<8x8xbf16, #tpu.memory_space<vmem>>, %arg7: memref<8x1xf32, #tpu.memory_space<vmem>>, %arg8: memref<8x16xbf16, #tpu.memory_space<vmem>>, %arg9: memref<8x1xf32, #tpu.memory_space<vmem>>, %arg10: memref<8x16xbf16, #tpu.memory_space<vmem>>, %arg11: memref<8x1xf32, #tpu.memory_space<vmem>>, %arg12: memref<1x8x128xf32, #tpu.memory_space<vmem>>) attributes {dimension_semantics = [#tpu.dimension_semantics<parallel>], iteration_bounds = array<i64: 2>, scalar_prefetch = 0 : i64, scratch_operands = 0 : i64, tpu.core_type = #tpu.core_type<tc>, window_params = [{transform_indices = @transform_0, window_bounds = array<i64: 1, 8, 128>}, {pipeline_mode = #tpu.pipeline_mode<synchronous>, transform_indices = @transform_1, window_bounds = array<i64: 8, 16>}, {pipeline_mode = #tpu.pipeline_mode<synchronous>, transform_indices = @transform_2, window_bounds = array<i64: 8, 1>}, {pipeline_mode = #tpu.pipeline_mode<synchronous>, transform_indices = @transform_3, window_bounds = array<i64: 8, 16>}, {pipeline_mode = #tpu.pipeline_mode<synchronous>, transform_indices = @transform_4, window_bounds = array<i64: 8, 1>}, {pipeline_mode = #tpu.pipeline_mode<synchronous>, transform_indices = @transform_5, window_bounds = array<i64: 8, 8>}, {pipeline_mode = #tpu.pipeline_mode<synchronous>, transform_indices = @transform_6, window_bounds = array<i64: 8, 1>}, {pipeline_mode = #tpu.pipeline_mode<synchronous>, transform_indices = @transform_7, window_bounds = array<i64: 8, 16>}, {pipeline_mode = #tpu.pipeline_mode<synchronous>, transform_indices = @transform_8, window_bounds = array<i64: 8, 1>}, {pipeline_mode = #tpu.pipeline_mode<synchronous>, transform_indices = @transform_9, window_bounds = array<i64: 8, 16>}, {pipeline_mode = #tpu.pipeline_mode<synchronous>, transform_indices = @transform_10, window_bounds = array<i64: 8, 1>}, {transform_indices = @transform_11, window_bounds = array<i64: 1, 8, 128>}]} {
    %c0 = arith.constant 0 : index
    %c0_0 = arith.constant 0 : index
    %c0_1 = arith.constant 0 : index
    %0 = vector.load %arg1[%c0, %c0_0, %c0_1] : memref<1x8x128xf32, #tpu.memory_space<vmem>>, vector<1x8x128xf32>
    %1 = vector.shape_cast %0 : vector<1x8x128xf32> to vector<8x128xf32>
    %c0_2 = arith.constant 0 : index
    %c0_3 = arith.constant 0 : index
    %2 = vector.load %arg2[%c0_2, %c0_3] : memref<8x16xbf16, #tpu.memory_space<vmem>>, vector<8x16xbf16>
    %c0_4 = arith.constant 0 : index
    %c0_5 = arith.constant 0 : index
    %3 = vector.load %arg3[%c0_4, %c0_5] : memref<8x1xf32, #tpu.memory_space<vmem>>, vector<8x1xf32>
    %c0_6 = arith.constant 0 : index
    %c0_7 = arith.constant 0 : index
    %4 = vector.load %arg4[%c0_6, %c0_7] : memref<8x16xbf16, #tpu.memory_space<vmem>>, vector<8x16xbf16>
    %c0_8 = arith.constant 0 : index
    %c0_9 = arith.constant 0 : index
    %5 = vector.load %arg5[%c0_8, %c0_9] : memref<8x1xf32, #tpu.memory_space<vmem>>, vector<8x1xf32>
    %c0_10 = arith.constant 0 : index
    %c0_11 = arith.constant 0 : index
    %6 = vector.load %arg6[%c0_10, %c0_11] : memref<8x8xbf16, #tpu.memory_space<vmem>>, vector<8x8xbf16>
    %c0_12 = arith.constant 0 : index
    %c0_13 = arith.constant 0 : index
    %7 = vector.load %arg7[%c0_12, %c0_13] : memref<8x1xf32, #tpu.memory_space<vmem>>, vector<8x1xf32>
    %c1_i32 = arith.constant 1 : i32
    %8 = tpu.dynamic_rotate %1 by %c1_i32 dim 1 : vector<8x128xf32>, i32 -> vector<8x128xf32>
    %9 = tpu.iota {dimensions = array<i32: 1>} : vector<8x128xi32>
    %c1_i32_14 = arith.constant 1 : i32
    %10 = vector.broadcast %c1_i32_14 : i32 to vector<8x128xi32>
    %11 = arith.cmpi slt, %9, %10 : vector<8x128xi32>
    %cst = arith.constant 0.000000e+00 : f32
    %12 = vector.broadcast %cst : f32 to vector<8x128xf32>
    %13 = arith.select %11, %12, %8 : vector<8x128xi1>, vector<8x128xf32>
    %14 = tpu.concatenate %13, %1 in 0 : vector<8x128xf32>, vector<8x128xf32> -> vector<16x128xf32>
    %15 = arith.truncf %14 : vector<16x128xf32> to vector<16x128xbf16>
    %cst_15 = arith.constant dense<0.000000e+00> : vector<8x128xf32>
    %16 = tpu.matmul %2, %15, %cst_15 {dimension_numbers = #tpu.dot_dimension_numbers<[1], [0], [0], [1], [0, 0, 1, 1], [], []>} : vector<8x16xbf16>, vector<16x128xbf16>, vector<8x128xf32> -> vector<8x128xf32>
    %17 = vector.broadcast %3 : vector<8x1xf32> to vector<8x128xf32>
    %18 = arith.addf %16, %17 : vector<8x128xf32>
    %cst_16 = arith.constant 0.000000e+00 : f32
    %19 = vector.broadcast %cst_16 : f32 to vector<8x128xf32>
    %20 = arith.maximumf %18, %19 : vector<8x128xf32>
    %c1_i32_17 = arith.constant 1 : i32
    %21 = tpu.dynamic_rotate %20 by %c1_i32_17 dim 1 : vector<8x128xf32>, i32 -> vector<8x128xf32>
    %22 = tpu.iota {dimensions = array<i32: 1>} : vector<8x128xi32>
    %c1_i32_18 = arith.constant 1 : i32
    %23 = vector.broadcast %c1_i32_18 : i32 to vector<8x128xi32>
    %24 = arith.cmpi slt, %22, %23 : vector<8x128xi32>
    %cst_19 = arith.constant 0.000000e+00 : f32
    %25 = vector.broadcast %cst_19 : f32 to vector<8x128xf32>
    %26 = arith.select %24, %25, %21 : vector<8x128xi1>, vector<8x128xf32>
    %27 = tpu.concatenate %26, %20 in 0 : vector<8x128xf32>, vector<8x128xf32> -> vector<16x128xf32>
    %28 = arith.truncf %27 : vector<16x128xf32> to vector<16x128xbf16>
    %cst_20 = arith.constant dense<0.000000e+00> : vector<8x128xf32>
    %29 = tpu.matmul %4, %28, %cst_20 {dimension_numbers = #tpu.dot_dimension_numbers<[1], [0], [0], [1], [0, 0, 1, 1], [], []>} : vector<8x16xbf16>, vector<16x128xbf16>, vector<8x128xf32> -> vector<8x128xf32>
    %30 = vector.broadcast %5 : vector<8x1xf32> to vector<8x128xf32>
    %31 = arith.addf %29, %30 : vector<8x128xf32>
    %cst_21 = arith.constant 0.000000e+00 : f32
    %32 = vector.broadcast %cst_21 : f32 to vector<8x128xf32>
    %33 = arith.maximumf %31, %32 : vector<8x128xf32>
    %34 = arith.truncf %1 : vector<8x128xf32> to vector<8x128xbf16>
    %cst_22 = arith.constant dense<0.000000e+00> : vector<8x128xf32>
    %35 = tpu.matmul %6, %34, %cst_22 {dimension_numbers = #tpu.dot_dimension_numbers<[1], [0], [0], [1], [0, 0, 1, 1], [], []>} : vector<8x8xbf16>, vector<8x128xbf16>, vector<8x128xf32> -> vector<8x128xf32>
    %36 = vector.broadcast %7 : vector<8x1xf32> to vector<8x128xf32>
    %37 = arith.addf %35, %36 : vector<8x128xf32>
    %38 = arith.addf %33, %37 : vector<8x128xf32>
    %cst_23 = arith.constant 0.000000e+00 : f32
    %39 = vector.broadcast %cst_23 : f32 to vector<8x128xf32>
    %40 = arith.maximumf %38, %39 : vector<8x128xf32>
    %c0_24 = arith.constant 0 : index
    %c0_25 = arith.constant 0 : index
    %41 = vector.load %arg8[%c0_24, %c0_25] : memref<8x16xbf16, #tpu.memory_space<vmem>>, vector<8x16xbf16>
    %c0_26 = arith.constant 0 : index
    %c0_27 = arith.constant 0 : index
    %42 = vector.load %arg9[%c0_26, %c0_27] : memref<8x1xf32, #tpu.memory_space<vmem>>, vector<8x1xf32>
    %c0_28 = arith.constant 0 : index
    %c0_29 = arith.constant 0 : index
    %43 = vector.load %arg10[%c0_28, %c0_29] : memref<8x16xbf16, #tpu.memory_space<vmem>>, vector<8x16xbf16>
    %c0_30 = arith.constant 0 : index
    %c0_31 = arith.constant 0 : index
    %44 = vector.load %arg11[%c0_30, %c0_31] : memref<8x1xf32, #tpu.memory_space<vmem>>, vector<8x1xf32>
    %c2_i32 = arith.constant 2 : i32
    %45 = tpu.dynamic_rotate %40 by %c2_i32 dim 1 : vector<8x128xf32>, i32 -> vector<8x128xf32>
    %46 = tpu.iota {dimensions = array<i32: 1>} : vector<8x128xi32>
    %c2_i32_32 = arith.constant 2 : i32
    %47 = vector.broadcast %c2_i32_32 : i32 to vector<8x128xi32>
    %48 = arith.cmpi slt, %46, %47 : vector<8x128xi32>
    %cst_33 = arith.constant 0.000000e+00 : f32
    %49 = vector.broadcast %cst_33 : f32 to vector<8x128xf32>
    %50 = arith.select %48, %49, %45 : vector<8x128xi1>, vector<8x128xf32>
    %51 = tpu.concatenate %50, %40 in 0 : vector<8x128xf32>, vector<8x128xf32> -> vector<16x128xf32>
    %52 = arith.truncf %51 : vector<16x128xf32> to vector<16x128xbf16>
    %cst_34 = arith.constant dense<0.000000e+00> : vector<8x128xf32>
    %53 = tpu.matmul %41, %52, %cst_34 {dimension_numbers = #tpu.dot_dimension_numbers<[1], [0], [0], [1], [0, 0, 1, 1], [], []>} : vector<8x16xbf16>, vector<16x128xbf16>, vector<8x128xf32> -> vector<8x128xf32>
    %54 = vector.broadcast %42 : vector<8x1xf32> to vector<8x128xf32>
    %55 = arith.addf %53, %54 : vector<8x128xf32>
    %cst_35 = arith.constant 0.000000e+00 : f32
    %56 = vector.broadcast %cst_35 : f32 to vector<8x128xf32>
    %57 = arith.maximumf %55, %56 : vector<8x128xf32>
    %c2_i32_36 = arith.constant 2 : i32
    %58 = tpu.dynamic_rotate %57 by %c2_i32_36 dim 1 : vector<8x128xf32>, i32 -> vector<8x128xf32>
    %59 = tpu.iota {dimensions = array<i32: 1>} : vector<8x128xi32>
    %c2_i32_37 = arith.constant 2 : i32
    %60 = vector.broadcast %c2_i32_37 : i32 to vector<8x128xi32>
    %61 = arith.cmpi slt, %59, %60 : vector<8x128xi32>
    %cst_38 = arith.constant 0.000000e+00 : f32
    %62 = vector.broadcast %cst_38 : f32 to vector<8x128xf32>
    %63 = arith.select %61, %62, %58 : vector<8x128xi1>, vector<8x128xf32>
    %64 = tpu.concatenate %63, %57 in 0 : vector<8x128xf32>, vector<8x128xf32> -> vector<16x128xf32>
    %65 = arith.truncf %64 : vector<16x128xf32> to vector<16x128xbf16>
    %cst_39 = arith.constant dense<0.000000e+00> : vector<8x128xf32>
    %66 = tpu.matmul %43, %65, %cst_39 {dimension_numbers = #tpu.dot_dimension_numbers<[1], [0], [0], [1], [0, 0, 1, 1], [], []>} : vector<8x16xbf16>, vector<16x128xbf16>, vector<8x128xf32> -> vector<8x128xf32>
    %67 = vector.broadcast %44 : vector<8x1xf32> to vector<8x128xf32>
    %68 = arith.addf %66, %67 : vector<8x128xf32>
    %cst_40 = arith.constant 0.000000e+00 : f32
    %69 = vector.broadcast %cst_40 : f32 to vector<8x128xf32>
    %70 = arith.maximumf %68, %69 : vector<8x128xf32>
    %71 = arith.addf %70, %40 : vector<8x128xf32>
    %cst_41 = arith.constant 0.000000e+00 : f32
    %72 = vector.broadcast %cst_41 : f32 to vector<8x128xf32>
    %73 = arith.maximumf %71, %72 : vector<8x128xf32>
    %c0_42 = arith.constant 0 : index
    %c0_43 = arith.constant 0 : index
    %c0_44 = arith.constant 0 : index
    %74 = vector.load %arg12[%c0_42, %c0_43, %c0_44] : memref<1x8x128xf32, #tpu.memory_space<vmem>>, vector<1x8x128xf32>
    %75 = vector.shape_cast %74 : vector<1x8x128xf32> to vector<8x128xf32>
    %76 = vector.shape_cast %73 : vector<8x128xf32> to vector<1x8x128xf32>
    tpu.vector_store %arg12[%c0_42, %c0_43, %c0_44], %76 {strides = array<i32>} : memref<1x8x128xf32, #tpu.memory_space<vmem>>, vector<1x8x128xf32>,
    return
  }
  func.func @transform_0(%arg0: i32) -> (i32, i32, i32) {
    %c0_i32 = arith.constant 0 : i32
    %c0_i32_0 = arith.constant 0 : i32
    %c0_i32_1 = arith.constant 0 : i32
    return %arg0, %c0_i32, %c0_i32_0 : i32, i32, i32
  }
  func.func @transform_1(%arg0: i32) -> (i32, i32) {
    %c0_i32 = arith.constant 0 : i32
    %c0_i32_0 = arith.constant 0 : i32
    %c0_i32_1 = arith.constant 0 : i32
    return %c0_i32, %c0_i32_0 : i32, i32
  }
  func.func @transform_2(%arg0: i32) -> (i32, i32) {
    %c0_i32 = arith.constant 0 : i32
    %c0_i32_0 = arith.constant 0 : i32
    %c0_i32_1 = arith.constant 0 : i32
    return %c0_i32, %c0_i32_0 : i32, i32
  }
  func.func @transform_3(%arg0: i32) -> (i32, i32) {
    %c0_i32 = arith.constant 0 : i32
    %c0_i32_0 = arith.constant 0 : i32
    %c0_i32_1 = arith.constant 0 : i32
    return %c0_i32, %c0_i32_0 : i32, i32
  }
  func.func @transform_4(%arg0: i32) -> (i32, i32) {
    %c0_i32 = arith.constant 0 : i32
    %c0_i32_0 = arith.constant 0 : i32
    %c0_i32_1 = arith.constant 0 : i32
    return %c0_i32, %c0_i32_0 : i32, i32
  }
  func.func @transform_5(%arg0: i32) -> (i32, i32) {
    %c0_i32 = arith.constant 0 : i32
    %c0_i32_0 = arith.constant 0 : i32
    %c0_i32_1 = arith.constant 0 : i32
    return %c0_i32, %c0_i32_0 : i32, i32
  }
  func.func @transform_6(%arg0: i32) -> (i32, i32) {
    %c0_i32 = arith.constant 0 : i32
    %c0_i32_0 = arith.constant 0 : i32
    %c0_i32_1 = arith.constant 0 : i32
    return %c0_i32, %c0_i32_0 : i32, i32
  }
  func.func @transform_7(%arg0: i32) -> (i32, i32) {
    %c0_i32 = arith.constant 0 : i32
    %c0_i32_0 = arith.constant 0 : i32
    %c0_i32_1 = arith.constant 0 : i32
    return %c0_i32, %c0_i32_0 : i32, i32
  }
  func.func @transform_8(%arg0: i32) -> (i32, i32) {
    %c0_i32 = arith.constant 0 : i32
    %c0_i32_0 = arith.constant 0 : i32
    %c0_i32_1 = arith.constant 0 : i32
    return %c0_i32, %c0_i32_0 : i32, i32
  }
  func.func @transform_9(%arg0: i32) -> (i32, i32) {
    %c0_i32 = arith.constant 0 : i32
    %c0_i32_0 = arith.constant 0 : i32
    %c0_i32_1 = arith.constant 0 : i32
    return %c0_i32, %c0_i32_0 : i32, i32
  }
  func.func @transform_10(%arg0: i32) -> (i32, i32) {
    %c0_i32 = arith.constant 0 : i32
    %c0_i32_0 = arith.constant 0 : i32
    %c0_i32_1 = arith.constant 0 : i32
    return %c0_i32, %c0_i32_0 : i32, i32
  }
  func.func @transform_11(%arg0: i32) -> (i32, i32, i32) {
    %c0_i32 = arith.constant 0 : i32
    %c0_i32_0 = arith.constant 0 : i32
    %c0_i32_1 = arith.constant 0 : i32
    return %arg0, %c0_i32, %c0_i32_0 : i32, i32, i32
  }
}

</mosaic_0001>

<llo_original>
// kernel: tpu_custom_call.1
$region0: #{tpu_custom_call.1}
  #allocation0 [shape = 'u32[]', space=smem, size = 0x4, offset = 0x4, fixed_abs, tag = 'smem constant byte address 0x4 - core index']
  #allocation1 [shape = 'u32[144,128]{1,0:T(1,128)}', space=vmem, size = 0x12000, scoped, tag = 'internal scratch']
  %s0 = inlined_call_operand.vmem [shape: f32[2,8,128], index: 0, kind: input, shape index: {}]
  %s1 = inlined_call_operand.vmem [shape: bf16[8,16], index: 1, kind: input, shape index: {}]
  %s2 = inlined_call_operand.vmem [shape: f32[8,1], index: 2, kind: input, shape index: {}]
  %s3 = inlined_call_operand.vmem [shape: bf16[8,16], index: 3, kind: input, shape index: {}]
  %s4 = inlined_call_operand.vmem [shape: f32[8,1], index: 4, kind: input, shape index: {}]
  %s5 = inlined_call_operand.vmem [shape: bf16[8,8], index: 5, kind: input, shape index: {}]
  %s6 = inlined_call_operand.vmem [shape: f32[8,1], index: 6, kind: input, shape index: {}]
  %s7 = inlined_call_operand.vmem [shape: bf16[8,16], index: 7, kind: input, shape index: {}]
  %s8 = inlined_call_operand.vmem [shape: f32[8,1], index: 8, kind: input, shape index: {}]
  %s9 = inlined_call_operand.vmem [shape: bf16[8,16], index: 9, kind: input, shape index: {}]
  %s10 = inlined_call_operand.vmem [shape: f32[8,1], index: 10, kind: input, shape index: {}]
  %s11 = inlined_call_operand.hbm [shape: f32[2,8,128], index: 11, kind: output, shape index: {}]
  %s12 = sld [smem:[#allocation0]]
  $region77: #{tpu_custom_call.1} parent=0
    _
  %s14 = ssub.s32 1, %s12
  %s15 = scalar_select 0, %s14, %s12
  $region1: #{tpu_custom_call.1} parent=0
    #allocation2 [shape = 'u8[8192]{0}', space=vmem, size = 0x2000, scoped, tag = 'output window, operand 0']
    #allocation3 [shape = 's32[2]{0}', space=sflag, size = 0x8, scoped, tag = 'scoped memory for tpu_custom_call.1']
    %16 = vsyncpa [#allocation3], 0
    %s17 = scalar_lea.sflag [#allocation3], 1
    %18 = vsyncpa %s17, 0
    loop: start=0, step=1, limit=4
    $region2: #{tpu_custom_call.1} parent=1 // loop_pre_header
      _
    $region3: #{tpu_custom_call.1} parent=1 // loop_header
      %s20 = sphi 0, %s24
      %p21 = scmp.ge.s32.totalorder %s20, 4
      %s30 = sphi 0, %s32
      %s33 = sphi 0, %s30
      %s34 = sphi 0, %s33
      %s50 = sphi 0, %s34
      %s54 = sphi 0, %s54
      %s56 = sphi 0, %s54
      %s57 = sphi 0, %s56
      %s71 = sphi 0, %s57
      %s75 = sphi 0, %s75
      %s77 = sphi 0, %s75
      %s78 = sphi 0, %s77
      %s92 = sphi 0, %s78
      %s96 = sphi 0, %s96
      %s98 = sphi 0, %s96
      %s99 = sphi 0, %s98
      %s113 = sphi 0, %s99
      %s117 = sphi 0, %s117
      %s119 = sphi 0, %s117
      %s120 = sphi 0, %s119
      %s134 = sphi 0, %s120
      %s138 = sphi 0, %s138
      %s140 = sphi 0, %s138
      %s141 = sphi 0, %s140
      %s155 = sphi 0, %s141
      %s159 = sphi 0, %s159
      %s161 = sphi 0, %s159
      %s162 = sphi 0, %s161
      %s176 = sphi 0, %s162
      %s180 = sphi 0, %s180
      %s182 = sphi 0, %s180
      %s183 = sphi 0, %s182
      %s197 = sphi 0, %s183
      %s201 = sphi 0, %s201
      %s203 = sphi 0, %s201
      %s204 = sphi 0, %s203
      %s218 = sphi 0, %s204
      %s222 = sphi 0, %s222
      %s224 = sphi 0, %s222
      %s225 = sphi 0, %s224
      %s239 = sphi 0, %s225
      %s243 = sphi 0, %s243
      %s245 = sphi 0, %s243
      %s246 = sphi 0, %s245
      %s260 = sphi 0, %s246
      %s266 = sphi 0, %s268
      %s269 = sphi 0, %s266
      %s270 = sphi 0, %s269
      %s286 = sphi 0, %s270
    $region4: #{tpu_custom_call.1} parent=1 // loop_header_branch
      %23 = sbr.rel (%p21) target = $region8
    $region5: #{tpu_custom_call.1} parent=1 // loop_body
      %s25 = ssub.s32 %s20, 1
      %s26 = ssub.s32 %s20, 2
      %s27 = sadd.s32 %s20, 1
      %s28 = ssub.s32 %s20, %s27
      %p29 = scmp.eq.s32.totalorder %s28, 0
      %s31 = sadd.s32 %s30, 1
      %s32 = scalar_select %p29, %s30, %s31
      %p35 = pneg %p29
      %p36 = scmp.eq.s32.totalorder %s20, 1
      %p37 = por %p35, %p36
      %p38 = scmp.ne.s32.totalorder %s30, %s33
      %p39 = scmp.eq.s32.totalorder %s20, 0
      %p40 = por %p38, %p39
      %p41 = scmp.ne.s32.totalorder %s30, %s33
      %p42 = scmp.eq.s32.totalorder %s25, 1
      %p43 = por %p41, %p42
      %p44 = scmp.ne.s32.totalorder %s33, %s34
      %p45 = scmp.eq.s32.totalorder %s25, 0
      %p46 = por %p44, %p45
      %p47 = scmp.ne.s32.totalorder %s33, %s34
      %p48 = scmp.eq.s32.totalorder %s26, 1
      %p49 = por %p47, %p48
      %p51 = scmp.ne.s32.totalorder %s34, %s50
      %p52 = scmp.eq.s32.totalorder %s26, 0
      %p53 = por %p51, %p52
      %s55 = sadd.s32 %s54, 1
      %p58 = scmp.eq.s32.totalorder %s20, 1
      %p59 = scmp.ne.s32.totalorder %s54, %s56
      %p60 = scmp.eq.s32.totalorder %s20, 0
      %p61 = por %p59, %p60
      %p62 = scmp.ne.s32.totalorder %s54, %s56
      %p63 = scmp.eq.s32.totalorder %s25, 1
      %p64 = por %p62, %p63
      %p65 = scmp.ne.s32.totalorder %s56, %s57
      %p66 = scmp.eq.s32.totalorder %s25, 0
      %p67 = por %p65, %p66
      %p68 = scmp.ne.s32.totalorder %s56, %s57
      %p69 = scmp.eq.s32.totalorder %s26, 1
      %p70 = por %p68, %p69
      %p72 = scmp.ne.s32.totalorder %s57, %s71
      %p73 = scmp.eq.s32.totalorder %s26, 0
      %p74 = por %p72, %p73
      %s76 = sadd.s32 %s75, 1
      %p79 = scmp.eq.s32.totalorder %s20, 1
      %p80 = scmp.ne.s32.totalorder %s75, %s77
      %p81 = scmp.eq.s32.totalorder %s20, 0
      %p82 = por %p80, %p81
      %p83 = scmp.ne.s32.totalorder %s75, %s77
      %p84 = scmp.eq.s32.totalorder %s25, 1
      %p85 = por %p83, %p84
      %p86 = scmp.ne.s32.totalorder %s77, %s78
      %p87 = scmp.eq.s32.totalorder %s25, 0
      %p88 = por %p86, %p87
      %p89 = scmp.ne.s32.totalorder %s77, %s78
      %p90 = scmp.eq.s32.totalorder %s26, 1
      %p91 = por %p89, %p90
      %p93 = scmp.ne.s32.totalorder %s78, %s92
      %p94 = scmp.eq.s32.totalorder %s26, 0
      %p95 = por %p93, %p94
      %s97 = sadd.s32 %s96, 1
      %p100 = scmp.eq.s32.totalorder %s20, 1
      %p101 = scmp.ne.s32.totalorder %s96, %s98
      %p102 = scmp.eq.s32.totalorder %s20, 0
      %p103 = por %p101, %p102
      %p104 = scmp.ne.s32.totalorder %s96, %s98
      %p105 = scmp.eq.s32.totalorder %s25, 1
      %p106 = por %p104, %p105
      %p107 = scmp.ne.s32.totalorder %s98, %s99
      %p108 = scmp.eq.s32.totalorder %s25, 0
      %p109 = por %p107, %p108
      %p110 = scmp.ne.s32.totalorder %s98, %s99
      %p111 = scmp.eq.s32.totalorder %s26, 1
      %p112 = por %p110, %p111
      %p114 = scmp.ne.s32.totalorder %s99, %s113
      %p115 = scmp.eq.s32.totalorder %s26, 0
      %p116 = por %p114, %p115
      %s118 = sadd.s32 %s117, 1
      %p121 = scmp.eq.s32.totalorder %s20, 1
      %p122 = scmp.ne.s32.totalorder %s117, %s119
      %p123 = scmp.eq.s32.totalorder %s20, 0
      %p124 = por %p122, %p123
      %p125 = scmp.ne.s32.totalorder %s117, %s119
      %p126 = scmp.eq.s32.totalorder %s25, 1
      %p127 = por %p125, %p126
      %p128 = scmp.ne.s32.totalorder %s119, %s120
      %p129 = scmp.eq.s32.totalorder %s25, 0
      %p130 = por %p128, %p129
      %p131 = scmp.ne.s32.totalorder %s119, %s120
      %p132 = scmp.eq.s32.totalorder %s26, 1
      %p133 = por %p131, %p132
      %p135 = scmp.ne.s32.totalorder %s120, %s134
      %p136 = scmp.eq.s32.totalorder %s26, 0
      %p137 = por %p135, %p136
      %s139 = sadd.s32 %s138, 1
      %p142 = scmp.eq.s32.totalorder %s20, 1
      %p143 = scmp.ne.s32.totalorder %s138, %s140
      %p144 = scmp.eq.s32.totalorder %s20, 0
      %p145 = por %p143, %p144
      %p146 = scmp.ne.s32.totalorder %s138, %s140
      %p147 = scmp.eq.s32.totalorder %s25, 1
      %p148 = por %p146, %p147
      %p149 = scmp.ne.s32.totalorder %s140, %s141
      %p150 = scmp.eq.s32.totalorder %s25, 0
      %p151 = por %p149, %p150
      %p152 = scmp.ne.s32.totalorder %s140, %s141
      %p153 = scmp.eq.s32.totalorder %s26, 1
      %p154 = por %p152, %p153
      %p156 = scmp.ne.s32.totalorder %s141, %s155
      %p157 = scmp.eq.s32.totalorder %s26, 0
      %p158 = por %p156, %p157
      %s160 = sadd.s32 %s159, 1
      %p163 = scmp.eq.s32.totalorder %s20, 1
      %p164 = scmp.ne.s32.totalorder %s159, %s161
      %p165 = scmp.eq.s32.totalorder %s20, 0
      %p166 = por %p164, %p165
      %p167 = scmp.ne.s32.totalorder %s159, %s161
      %p168 = scmp.eq.s32.totalorder %s25, 1
      %p169 = por %p167, %p168
      %p170 = scmp.ne.s32.totalorder %s161, %s162
      %p171 = scmp.eq.s32.totalorder %s25, 0
      %p172 = por %p170, %p171
      %p173 = scmp.ne.s32.totalorder %s161, %s162
      %p174 = scmp.eq.s32.totalorder %s26, 1
      %p175 = por %p173, %p174
      %p177 = scmp.ne.s32.totalorder %s162, %s176
      %p178 = scmp.eq.s32.totalorder %s26, 0
      %p179 = por %p177, %p178
      %s181 = sadd.s32 %s180, 1
      %p184 = scmp.eq.s32.totalorder %s20, 1
      %p185 = scmp.ne.s32.totalorder %s180, %s182
      %p186 = scmp.eq.s32.totalorder %s20, 0
      %p187 = por %p185, %p186
      %p188 = scmp.ne.s32.totalorder %s180, %s182
      %p189 = scmp.eq.s32.totalorder %s25, 1
      %p190 = por %p188, %p189
      %p191 = scmp.ne.s32.totalorder %s182, %s183
      %p192 = scmp.eq.s32.totalorder %s25, 0
      %p193 = por %p191, %p192
      %p194 = scmp.ne.s32.totalorder %s182, %s183
      %p195 = scmp.eq.s32.totalorder %s26, 1
      %p196 = por %p194, %p195
      %p198 = scmp.ne.s32.totalorder %s183, %s197
      %p199 = scmp.eq.s32.totalorder %s26, 0
      %p200 = por %p198, %p199
      %s202 = sadd.s32 %s201, 1
      %p205 = scmp.eq.s32.totalorder %s20, 1
      %p206 = scmp.ne.s32.totalorder %s201, %s203
      %p207 = scmp.eq.s32.totalorder %s20, 0
      %p208 = por %p206, %p207
      %p209 = scmp.ne.s32.totalorder %s201, %s203
      %p210 = scmp.eq.s32.totalorder %s25, 1
      %p211 = por %p209, %p210
      %p212 = scmp.ne.s32.totalorder %s203, %s204
      %p213 = scmp.eq.s32.totalorder %s25, 0
      %p214 = por %p212, %p213
      %p215 = scmp.ne.s32.totalorder %s203, %s204
      %p216 = scmp.eq.s32.totalorder %s26, 1
      %p217 = por %p215, %p216
      %p219 = scmp.ne.s32.totalorder %s204, %s218
      %p220 = scmp.eq.s32.totalorder %s26, 0
      %p221 = por %p219, %p220
      %s223 = sadd.s32 %s222, 1
      %p226 = scmp.eq.s32.totalorder %s20, 1
      %p227 = scmp.ne.s32.totalorder %s222, %s224
      %p228 = scmp.eq.s32.totalorder %s20, 0
      %p229 = por %p227, %p228
      %p230 = scmp.ne.s32.totalorder %s222, %s224
      %p231 = scmp.eq.s32.totalorder %s25, 1
      %p232 = por %p230, %p231
      %p233 = scmp.ne.s32.totalorder %s224, %s225
      %p234 = scmp.eq.s32.totalorder %s25, 0
      %p235 = por %p233, %p234
      %p236 = scmp.ne.s32.totalorder %s224, %s225
      %p237 = scmp.eq.s32.totalorder %s26, 1
      %p238 = por %p236, %p237
      %p240 = scmp.ne.s32.totalorder %s225, %s239
      %p241 = scmp.eq.s32.totalorder %s26, 0
      %p242 = por %p240, %p241
      %s244 = sadd.s32 %s243, 1
      %p247 = scmp.eq.s32.totalorder %s20, 1
      %p248 = scmp.ne.s32.totalorder %s243, %s245
      %p249 = scmp.eq.s32.totalorder %s20, 0
      %p250 = por %p248, %p249
      %p251 = scmp.ne.s32.totalorder %s243, %s245
      %p252 = scmp.eq.s32.totalorder %s25, 1
      %p253 = por %p251, %p252
      %p254 = scmp.ne.s32.totalorder %s245, %s246
      %p255 = scmp.eq.s32.totalorder %s25, 0
      %p256 = por %p254, %p255
      %p257 = scmp.ne.s32.totalorder %s245, %s246
      %p258 = scmp.eq.s32.totalorder %s26, 1
      %p259 = por %p257, %p258
      %p261 = scmp.ne.s32.totalorder %s246, %s260
      %p262 = scmp.eq.s32.totalorder %s26, 0
      %p263 = por %p261, %p262
      %s264 = ssub.s32 %s20, %s27
      %p265 = scmp.eq.s32.totalorder %s264, 0
      %s267 = sadd.s32 %s266, 1
      %s268 = scalar_select %p265, %s266, %s267
      %p271 = pneg %p265
      %p272 = scmp.eq.s32.totalorder %s20, 1
      %p273 = por %p271, %p272
      %p274 = scmp.ne.s32.totalorder %s266, %s269
      %p275 = scmp.eq.s32.totalorder %s20, 0
      %p276 = por %p274, %p275
      %p277 = scmp.ne.s32.totalorder %s266, %s269
      %p278 = scmp.eq.s32.totalorder %s25, 1
      %p279 = por %p277, %p278
      %p280 = scmp.ne.s32.totalorder %s269, %s270
      %p281 = scmp.eq.s32.totalorder %s25, 0
      %p282 = por %p280, %p281
      %p283 = scmp.ne.s32.totalorder %s269, %s270
      %p284 = scmp.eq.s32.totalorder %s26, 1
      %p285 = por %p283, %p284
      %p287 = scmp.ne.s32.totalorder %s270, %s286
      %p288 = scmp.eq.s32.totalorder %s26, 0
      %p289 = por %p287, %p288
      %p290 = scmp.le.s32.totalorder 1, %s20
      %p291 = scmp.lt.s32.totalorder %s20, 3
      %p292 = pnand %p290, %p291
      %p293 = pneg %p292
      // Predicated region
      $region9: #{tpu_custom_call.1} parent=5 // pred_check
        _
      $region10: #{tpu_custom_call.1} parent=5 // pred_check_branch
        %295 = sbr.rel (%p292) target = $region12
      $region11: #{tpu_custom_call.1} parent=5 // pred_region
        %s296 = ssub.s32 %s20, 1
        // Predicated region
        $region13: #{tpu_custom_call.1} parent=11 // pred_check
          %p297 = pneg %p67
        $region14: #{tpu_custom_call.1} parent=11 // pred_check_branch
          %299 = sbr.rel (%p297) target = $region16
        $region15: #{tpu_custom_call.1} parent=11 // pred_region
          _
        $region16: #{tpu_custom_call.1} parent=11 // pred_fallthru
          _
        // Predicated region
        $region17: #{tpu_custom_call.1} parent=11 // pred_check
          %p300 = pneg %p88
        $region18: #{tpu_custom_call.1} parent=11 // pred_check_branch
          %302 = sbr.rel (%p300) target = $region20
        $region19: #{tpu_custom_call.1} parent=11 // pred_region
          _
        $region20: #{tpu_custom_call.1} parent=11 // pred_fallthru
          _
        // Predicated region
        $region21: #{tpu_custom_call.1} parent=11 // pred_check
          %p303 = pneg %p109
        $region22: #{tpu_custom_call.1} parent=11 // pred_check_branch
          %305 = sbr.rel (%p303) target = $region24
        $region23: #{tpu_custom_call.1} parent=11 // pred_region
          _
        $region24: #{tpu_custom_call.1} parent=11 // pred_fallthru
          _
        // Predicated region
        $region25: #{tpu_custom_call.1} parent=11 // pred_check
          %p306 = pneg %p130
        $region26: #{tpu_custom_call.1} parent=11 // pred_check_branch
          %308 = sbr.rel (%p306) target = $region28
        $region27: #{tpu_custom_call.1} parent=11 // pred_region
          _
        $region28: #{tpu_custom_call.1} parent=11 // pred_fallthru
          _
        // Predicated region
        $region29: #{tpu_custom_call.1} parent=11 // pred_check
          %p309 = pneg %p151
        $region30: #{tpu_custom_call.1} parent=11 // pred_check_branch
          %311 = sbr.rel (%p309) target = $region32
        $region31: #{tpu_custom_call.1} parent=11 // pred_region
          _
        $region32: #{tpu_custom_call.1} parent=11 // pred_fallthru
          _
        // Predicated region
        $region33: #{tpu_custom_call.1} parent=11 // pred_check
          %p312 = pneg %p172
        $region34: #{tpu_custom_call.1} parent=11 // pred_check_branch
          %314 = sbr.rel (%p312) target = $region36
        $region35: #{tpu_custom_call.1} parent=11 // pred_region
          _
        $region36: #{tpu_custom_call.1} parent=11 // pred_fallthru
          _
        // Predicated region
        $region37: #{tpu_custom_call.1} parent=11 // pred_check
          %p315 = pneg %p193
        $region38: #{tpu_custom_call.1} parent=11 // pred_check_branch
          %317 = sbr.rel (%p315) target = $region40
        $region39: #{tpu_custom_call.1} parent=11 // pred_region
          _
        $region40: #{tpu_custom_call.1} parent=11 // pred_fallthru
          _
        // Predicated region
        $region41: #{tpu_custom_call.1} parent=11 // pred_check
          %p318 = pneg %p214
        $region42: #{tpu_custom_call.1} parent=11 // pred_check_branch
          %320 = sbr.rel (%p318) target = $region44
        $region43: #{tpu_custom_call.1} parent=11 // pred_region
          _
        $region44: #{tpu_custom_call.1} parent=11 // pred_fallthru
          _
        // Predicated region
        $region45: #{tpu_custom_call.1} parent=11 // pred_check
          %p321 = pneg %p235
        $region46: #{tpu_custom_call.1} parent=11 // pred_check_branch
          %323 = sbr.rel (%p321) target = $region48
        $region47: #{tpu_custom_call.1} parent=11 // pred_region
          _
        $region48: #{tpu_custom_call.1} parent=11 // pred_fallthru
          _
        // Predicated region
        $region49: #{tpu_custom_call.1} parent=11 // pred_check
          %p324 = pneg %p256
        $region50: #{tpu_custom_call.1} parent=11 // pred_check_branch
          %326 = sbr.rel (%p324) target = $region52
        $region51: #{tpu_custom_call.1} parent=11 // pred_region
          _
        $region52: #{tpu_custom_call.1} parent=11 // pred_fallthru
          _
      $region12: #{tpu_custom_call.1} parent=5 // pred_fallthru
        _
      %p327 = scmp.lt.s32.totalorder %s20, 2
      // Predicated region
      $region53: #{tpu_custom_call.1} parent=5 // pred_check
        %p328 = pneg %p327
      $region54: #{tpu_custom_call.1} parent=5 // pred_check_branch
        %330 = sbr.rel (%p328) target = $region56
      $region55: #{tpu_custom_call.1} parent=5 // pred_region
        // Predicated region
        $region57: #{tpu_custom_call.1} parent=55 // pred_check
          %p331 = pneg %p40
        $region58: #{tpu_custom_call.1} parent=55 // pred_check_branch
          %333 = sbr.rel (%p331) target = $region60
        $region59: #{tpu_custom_call.1} parent=55 // pred_region
          %p334 = scmp.lt.s32.totalorder %s20, 1
          %s335 = scalar_select %p334, %s20, 1
          %s336 = smul.addr %s335, 8
          %s337 = scalar_lea.vmem %s0, %s336
        $region60: #{tpu_custom_call.1} parent=55 // pred_fallthru
          _
      $region56: #{tpu_custom_call.1} parent=5 // pred_fallthru
        _
      %p338 = scmp.le.s32.totalorder 1, %s20
      %p339 = scmp.lt.s32.totalorder %s20, 3
      %p340 = pnand %p338, %p339
      %p341 = pneg %p340
      // Predicated region
      $region61: #{tpu_custom_call.1} parent=5 // pred_check
        _
      $region62: #{tpu_custom_call.1} parent=5 // pred_check_branch
        %343 = sbr.rel (%p340) target = $region64
      $region63: #{tpu_custom_call.1} parent=5 // pred_region
        %s344 = ssub.s32 %s20, 1
        %p345 = scmp.lt.s32.totalorder %s25, 1
        %s346 = scalar_select %p345, %s25, 1
        %s347 = smul.addr %s346, 8
        %s348 = scalar_lea.vmem %s0, %s347
        %p349 = pneg %p46
        %p350 = pneg %p43
        %p351 = pneg %p67
        %p352 = pneg %p64
        %p353 = pneg %p88
        %p354 = pneg %p85
        %p355 = pneg %p109
        %p356 = pneg %p106
        %p357 = pneg %p130
        %p358 = pneg %p127
        %p359 = pneg %p151
        %p360 = pneg %p148
        %p361 = pneg %p172
        %p362 = pneg %p169
        %p363 = pneg %p193
        %p364 = pneg %p190
        %p365 = pneg %p214
        %p366 = pneg %p211
        %p367 = pneg %p235
        %p368 = pneg %p232
        %p369 = pneg %p256
        %p370 = pneg %p253
        %p371 = pneg %p282
        %p372 = pneg %p279
        %s373 = sand.u32 %s269, 1
        %s374 = scalar_lea.sflag [#allocation3], %s373
        %s375 = sand.u32 %s269, 1
        %s376 = smul.addr %s375, 8
        %s377 = scalar_lea.vmem [#allocation2], %s376
        %p378 = scmp.lt.s32.totalorder %s25, 1
        %s379 = scalar_select %p378, %s25, 1
        %s380 = smul.addr %s379, 8
        %s381 = scalar_lea.vmem %s0, %s380
        %v383 = vld [vmem:[%s381] sm:$0xff]
        %v384 = vld [vmem:[%s1] sm:$0xf]
        %v385 = vld [vmem:[%s2] sm:$0xff]
        %v386 = vld [vmem:[%s3] sm:$0xf]
        %v387 = vld [vmem:[%s4] sm:$0xff]
        %v388 = vld [vmem:[%s5] sm:$0xf]
        %v389 = vld [vmem:[%s6] sm:$0xff]
        %390 = vrot.lane.b32.xlu0 %v383, 1
        %v391 = vpop.permute.xlu0 %390
        %v392 = vlaneseq
        %v393 = vand.u32 %v392, 127
        %vm394 = vcmp.lt.s32.totalorder %v393, 1
        %v395 = vsel %vm394, 0.0, %v391
        %v396 = vpack.c.bf16 %v383, %v395
        %398 = vset.pattern.permute.xlu0 0
        %399 = vperm.xlu0 %398, %v385
        %v400 = vpop.permute.xlu0 %399
        %vm402 = vcmask 130048
        %v404 = vsel %vm402, %v384, 0
        %406 = vmatprep.subr.bf16.mxu0 0
        %407 = vmatpush1.bf16.msra.mxu0 0
        %408 = vmatprep.subr.bf16.mxu0 0
        %409 = vmatpush1.bf16.msra.mxu0 0
        %410 = vmatprep.subr.bf16.mxu0 0
        %411 = vmatpush1.bf16.msra.mxu0 0
        %412 = vmatprep.subr.bf16.mxu0 0
        %413 = vmatpush1.bf16.msra.mxu0 0
        %414 = vmatprep.subr.bf16.mxu0 0
        %415 = vmatpush1.bf16.msra.mxu0 0
        %416 = vmatprep.subr.bf16.mxu0 0
        %417 = vmatpush1.bf16.msra.mxu0 0
        %418 = vmatprep.subr.bf16.mxu0 0
        %419 = vmatpush1.bf16.msra.mxu0 0
        %420 = vmatprep.subr.bf16.mxu0 0
        %421 = vmatpush1.bf16.msra.mxu0 %v396
        %422 = vmatprep.subr.bf16.mxu0 0
        %423 = vmatpush2.bf16.msra.mxu0 0
        %424 = vmatprep.subr.bf16.mxu0 0
        %425 = vmatpush2.bf16.msra.mxu0 0
        %426 = vmatprep.subr.bf16.mxu0 0
        %427 = vmatpush2.bf16.msra.mxu0 0
        %428 = vmatprep.subr.bf16.mxu0 0
        %429 = vmatpush2.bf16.msra.mxu0 0
        %430 = vmatprep.subr.bf16.mxu0 0
        %431 = vmatpush2.bf16.msra.mxu0 0
        %432 = vmatprep.subr.bf16.mxu0 0
        %433 = vmatpush2.bf16.msra.mxu0 0
        %434 = vmatprep.subr.bf16.mxu0 0
        %435 = vmatpush2.bf16.msra.mxu0 0
        %436 = vmatprep.subr.bf16.mxu0 0
        %437 = vmatpush2.bf16.msra.mxu0 0
        %438 = vmatprep.mubr.bf16.mxu0 0
        %439 = vmatmul.mubr.bf16.gmra.mxu0 %v404
        %v440 = vpop.f32.mrf.mxu0
        %v441 = vadd.f32 %v400, %v440
        %v442 = vpop.f32.mrf.mxu0
        %v443 = vpop.f32.mrf.mxu0
        %v444 = vpop.f32.mrf.mxu0
        %445 = vdwg.mxu0
        %v446 = vmax.f32 %v441, 0.0
        %447 = vrot.lane.b32.xlu0 %v446, 1
        %v448 = vpop.permute.xlu0 %447
        %v449 = vsel %vm394, 0.0, %v448
        %v450 = vpack.c.bf16 %v446, %v449
        %452 = vset.pattern.permute.xlu0 0
        %453 = vperm.xlu0 %452, %v387
        %v454 = vpop.permute.xlu0 %453
        %v457 = vsel %vm402, %v386, 0
        %459 = vmatprep.subr.bf16.mxu0 0
        %460 = vmatpush1.bf16.msra.mxu0 0
        %461 = vmatprep.subr.bf16.mxu0 0
        %462 = vmatpush1.bf16.msra.mxu0 0
        %463 = vmatprep.subr.bf16.mxu0 0
        %464 = vmatpush1.bf16.msra.mxu0 0
        %465 = vmatprep.subr.bf16.mxu0 0
        %466 = vmatpush1.bf16.msra.mxu0 0
        %467 = vmatprep.subr.bf16.mxu0 0
        %468 = vmatpush1.bf16.msra.mxu0 0
        %469 = vmatprep.subr.bf16.mxu0 0
        %470 = vmatpush1.bf16.msra.mxu0 0
        %471 = vmatprep.subr.bf16.mxu0 0
        %472 = vmatpush1.bf16.msra.mxu0 0
        %473 = vmatprep.subr.bf16.mxu0 0
        %474 = vmatpush1.bf16.msra.mxu0 %v450
        %475 = vmatprep.subr.bf16.mxu0 0
        %476 = vmatpush2.bf16.msra.mxu0 0
        %477 = vmatprep.subr.bf16.mxu0 0
        %478 = vmatpush2.bf16.msra.mxu0 0
        %479 = vmatprep.subr.bf16.mxu0 0
        %480 = vmatpush2.bf16.msra.mxu0 0
        %481 = vmatprep.subr.bf16.mxu0 0
        %482 = vmatpush2.bf16.msra.mxu0 0
        %483 = vmatprep.subr.bf16.mxu0 0
        %484 = vmatpush2.bf16.msra.mxu0 0
        %485 = vmatprep.subr.bf16.mxu0 0
        %486 = vmatpush2.bf16.msra.mxu0 0
        %487 = vmatprep.subr.bf16.mxu0 0
        %488 = vmatpush2.bf16.msra.mxu0 0
        %489 = vmatprep.subr.bf16.mxu0 0
        %490 = vmatpush2.bf16.msra.mxu0 0
        %491 = vmatprep.mubr.bf16.mxu0 0
        %492 = vmatmul.mubr.bf16.gmra.mxu0 %v457
        %v493 = vpop.f32.mrf.mxu0
        %v494 = vadd.f32 %v454, %v493
        %v495 = vpop.f32.mrf.mxu0
        %v496 = vpop.f32.mrf.mxu0
        %v497 = vpop.f32.mrf.mxu0
        %498 = vdwg.mxu0
        %v499 = vmax.f32 %v494, 0.0
        %v500 = vpack.c.bf16 %v383, %v383
        %502 = vset.pattern.permute.xlu0 0
        %503 = vperm.xlu0 %502, %v389
        %v504 = vpop.permute.xlu0 %503
        %vm506 = vcmask 64512
        %v508 = vsel %vm506, %v388, 0
        %vm510 = vcmask 1043456
        %v512 = vsel %vm510, %v500, 0
        %514 = vmatprep.subr.bf16.mxu0 0
        %515 = vmatpush1.bf16.msra.mxu0 0
        %516 = vmatprep.subr.bf16.mxu0 0
        %517 = vmatpush1.bf16.msra.mxu0 0
        %518 = vmatprep.subr.bf16.mxu0 0
        %519 = vmatpush1.bf16.msra.mxu0 0
        %520 = vmatprep.subr.bf16.mxu0 0
        %521 = vmatpush1.bf16.msra.mxu0 0
        %522 = vmatprep.subr.bf16.mxu0 0
        %523 = vmatpush1.bf16.msra.mxu0 0
        %524 = vmatprep.subr.bf16.mxu0 0
        %525 = vmatpush1.bf16.msra.mxu0 0
        %526 = vmatprep.subr.bf16.mxu0 0
        %527 = vmatpush1.bf16.msra.mxu0 0
        %528 = vmatprep.subr.bf16.mxu0 0
        %529 = vmatpush1.bf16.msra.mxu0 %v512
        %530 = vmatprep.subr.bf16.mxu0 0
        %531 = vmatpush2.bf16.msra.mxu0 0
        %532 = vmatprep.subr.bf16.mxu0 0
        %533 = vmatpush2.bf16.msra.mxu0 0
        %534 = vmatprep.subr.bf16.mxu0 0
        %535 = vmatpush2.bf16.msra.mxu0 0
        %536 = vmatprep.subr.bf16.mxu0 0
        %537 = vmatpush2.bf16.msra.mxu0 0
        %538 = vmatprep.subr.bf16.mxu0 0
        %539 = vmatpush2.bf16.msra.mxu0 0
        %540 = vmatprep.subr.bf16.mxu0 0
        %541 = vmatpush2.bf16.msra.mxu0 0
        %542 = vmatprep.subr.bf16.mxu0 0
        %543 = vmatpush2.bf16.msra.mxu0 0
        %544 = vmatprep.subr.bf16.mxu0 0
        %545 = vmatpush2.bf16.msra.mxu0 0
        %546 = vmatprep.mubr.bf16.mxu0 0
        %547 = vmatmul.mubr.bf16.gmra.mxu0 %v508
        %v548 = vpop.f32.mrf.mxu0
        %v549 = vadd.f32 %v504, %v548
        %v550 = vpop.f32.mrf.mxu0
        %v551 = vpop.f32.mrf.mxu0
        %v552 = vpop.f32.mrf.mxu0
        %553 = vdwg.mxu0
        %v554 = vadd.f32 %v499, %v549
        %v555 = vmax.f32 %v554, 0.0
        %v556 = vld [vmem:[%s7] sm:$0xf]
        %v557 = vld [vmem:[%s8] sm:$0xff]
        %v558 = vld [vmem:[%s9] sm:$0xf]
        %v559 = vld [vmem:[%s10] sm:$0xff]
        %560 = vrot.lane.b32.xlu0 %v555, 2
        %v561 = vpop.permute.xlu0 %560
        %vm562 = vcmp.lt.s32.totalorder %v393, 2
        %v563 = vsel %vm562, 0.0, %v561
        %v564 = vpack.c.bf16 %v555, %v563
        %566 = vset.pattern.permute.xlu0 0
        %567 = vperm.xlu0 %566, %v557
        %v568 = vpop.permute.xlu0 %567
        %v571 = vsel %vm402, %v556, 0
        %573 = vmatprep.subr.bf16.mxu0 0
        %574 = vmatpush1.bf16.msra.mxu0 0
        %575 = vmatprep.subr.bf16.mxu0 0
        %576 = vmatpush1.bf16.msra.mxu0 0
        %577 = vmatprep.subr.bf16.mxu0 0
        %578 = vmatpush1.bf16.msra.mxu0 0
        %579 = vmatprep.subr.bf16.mxu0 0
        %580 = vmatpush1.bf16.msra.mxu0 0
        %581 = vmatprep.subr.bf16.mxu0 0
        %582 = vmatpush1.bf16.msra.mxu0 0
        %583 = vmatprep.subr.bf16.mxu0 0
        %584 = vmatpush1.bf16.msra.mxu0 0
        %585 = vmatprep.subr.bf16.mxu0 0
        %586 = vmatpush1.bf16.msra.mxu0 0
        %587 = vmatprep.subr.bf16.mxu0 0
        %588 = vmatpush1.bf16.msra.mxu0 %v564
        %589 = vmatprep.subr.bf16.mxu0 0
        %590 = vmatpush2.bf16.msra.mxu0 0
        %591 = vmatprep.subr.bf16.mxu0 0
        %592 = vmatpush2.bf16.msra.mxu0 0
        %593 = vmatprep.subr.bf16.mxu0 0
        %594 = vmatpush2.bf16.msra.mxu0 0
        %595 = vmatprep.subr.bf16.mxu0 0
        %596 = vmatpush2.bf16.msra.mxu0 0
        %597 = vmatprep.subr.bf16.mxu0 0
        %598 = vmatpush2.bf16.msra.mxu0 0
        %599 = vmatprep.subr.bf16.mxu0 0
        %600 = vmatpush2.bf16.msra.mxu0 0
        %601 = vmatprep.subr.bf16.mxu0 0
        %602 = vmatpush2.bf16.msra.mxu0 0
        %603 = vmatprep.subr.bf16.mxu0 0
        %604 = vmatpush2.bf16.msra.mxu0 0
        %605 = vmatprep.mubr.bf16.mxu0 0
        %606 = vmatmul.mubr.bf16.gmra.mxu0 %v571
        %v607 = vpop.f32.mrf.mxu0
        %v608 = vadd.f32 %v568, %v607
        %v609 = vpop.f32.mrf.mxu0
        %v610 = vpop.f32.mrf.mxu0
        %v611 = vpop.f32.mrf.mxu0
        %612 = vdwg.mxu0
        %v613 = vmax.f32 %v608, 0.0
        %614 = vrot.lane.b32.xlu0 %v613, 2
        %v615 = vpop.permute.xlu0 %614
        %v616 = vsel %vm562, 0.0, %v615
        %v617 = vpack.c.bf16 %v613, %v616
        %619 = vset.pattern.permute.xlu0 0
        %620 = vperm.xlu0 %619, %v559
        %v621 = vpop.permute.xlu0 %620
        %v624 = vsel %vm402, %v558, 0
        %626 = vmatprep.subr.bf16.mxu0 0
        %627 = vmatpush1.bf16.msra.mxu0 0
        %628 = vmatprep.subr.bf16.mxu0 0
        %629 = vmatpush1.bf16.msra.mxu0 0
        %630 = vmatprep.subr.bf16.mxu0 0
        %631 = vmatpush1.bf16.msra.mxu0 0
        %632 = vmatprep.subr.bf16.mxu0 0
        %633 = vmatpush1.bf16.msra.mxu0 0
        %634 = vmatprep.subr.bf16.mxu0 0
        %635 = vmatpush1.bf16.msra.mxu0 0
        %636 = vmatprep.subr.bf16.mxu0 0
        %637 = vmatpush1.bf16.msra.mxu0 0
        %638 = vmatprep.subr.bf16.mxu0 0
        %639 = vmatpush1.bf16.msra.mxu0 0
        %640 = vmatprep.subr.bf16.mxu0 0
        %641 = vmatpush1.bf16.msra.mxu0 %v617
        %642 = vmatprep.subr.bf16.mxu0 0
        %643 = vmatpush2.bf16.msra.mxu0 0
        %644 = vmatprep.subr.bf16.mxu0 0
        %645 = vmatpush2.bf16.msra.mxu0 0
        %646 = vmatprep.subr.bf16.mxu0 0
        %647 = vmatpush2.bf16.msra.mxu0 0
        %648 = vmatprep.subr.bf16.mxu0 0
        %649 = vmatpush2.bf16.msra.mxu0 0
        %650 = vmatprep.subr.bf16.mxu0 0
        %651 = vmatpush2.bf16.msra.mxu0 0
        %652 = vmatprep.subr.bf16.mxu0 0
        %653 = vmatpush2.bf16.msra.mxu0 0
        %654 = vmatprep.subr.bf16.mxu0 0
        %655 = vmatpush2.bf16.msra.mxu0 0
        %656 = vmatprep.subr.bf16.mxu0 0
        %657 = vmatpush2.bf16.msra.mxu0 0
        %658 = vmatprep.mubr.bf16.mxu0 0
        %659 = vmatmul.mubr.bf16.gmra.mxu0 %v624
        %v660 = vpop.f32.mrf.mxu0
        %v661 = vadd.f32 %v621, %v660
        %v662 = vpop.f32.mrf.mxu0
        %v663 = vpop.f32.mrf.mxu0
        %v664 = vpop.f32.mrf.mxu0
        %665 = vdwg.mxu0
        %v666 = vmax.f32 %v661, 0.0
        %v667 = vadd.f32 %v666, %v555
        %v668 = vmax.f32 %v667, 0.0
        %669 = vst [vmem:[%s377] sm:$0xff] %v668
        %s670 = sand.u32 %s269, 1
        %s671 = scalar_lea.sflag [#allocation3], %s670
        %s672 = sand.u32 %s269, 1
        %s673 = smul.addr %s672, 8
        %s674 = scalar_lea.vmem [#allocation2], %s673
        // Predicated region
        $region65: #{tpu_custom_call.1} parent=63 // pred_check
          %p675 = pneg %p279
        $region66: #{tpu_custom_call.1} parent=63 // pred_check_branch
          %677 = sbr.rel (%p675) target = $region68
        $region67: #{tpu_custom_call.1} parent=63 // pred_region
          %s679 = ssub.s32 128, 128
          %680 = vsyncadd %s671, %s679
          %s681 = smul.addr %s25, 128
          %s682 = scalar_lea.hbm %s11, %s681
          %s684 = sshll.u32 %s674, 4
          %s685 = int_to_ptr.vmem [resolvable:$true] %s684
          %687 = dma.vmem_to_hbm [thread:$0]  %s685, 128, %s682, %s671
        $region68: #{tpu_custom_call.1} parent=63 // pred_fallthru
          _
      $region64: #{tpu_custom_call.1} parent=5 // pred_fallthru
        _
      %p688 = scmp.le.s32.totalorder 2, %s20
      // Predicated region
      $region69: #{tpu_custom_call.1} parent=5 // pred_check
        %p689 = pneg %p688
      $region70: #{tpu_custom_call.1} parent=5 // pred_check_branch
        %691 = sbr.rel (%p689) target = $region72
      $region71: #{tpu_custom_call.1} parent=5 // pred_region
        %s692 = ssub.s32 %s20, 2
        // Predicated region
        $region73: #{tpu_custom_call.1} parent=71 // pred_check
          %p693 = pneg %p285
        $region74: #{tpu_custom_call.1} parent=71 // pred_check_branch
          %695 = sbr.rel (%p693) target = $region76
        $region75: #{tpu_custom_call.1} parent=71 // pred_region
          %s696 = sand.u32 %s270, 1
          %s697 = scalar_lea.sflag [#allocation3], %s696
          %s698 = sand.u32 %s270, 1
          %s699 = smul.addr %s698, 8
          %s700 = scalar_lea.vmem [#allocation2], %s699
          %701 = dma.done %s697, 128
        $region76: #{tpu_custom_call.1} parent=71 // pred_fallthru
          _
      $region72: #{tpu_custom_call.1} parent=5 // pred_fallthru
        _
    $region6: #{tpu_custom_call.1} parent=1 // loop_footer
      %s24 = sadd.s32 1, %s20
    $region7: #{tpu_custom_call.1} parent=1 // loop_footer_branch
      %19 = sbr.rel target = $region3
    $region8: #{tpu_custom_call.1} parent=1 // loop_exit
      _
    %702 = vsyncpa [#allocation3], 1
    %s703 = scalar_lea.sflag [#allocation3], 1
    %704 = vsyncpa %s703, 1

</llo_original>
